<compile_context>
chip_gen: v7x
topology: tpu7x:2x2x1
jax: 0.10.0
libtpu: 0.0.40
codegen_flags: <defaults>
</compile_context>

<pallas_src>
import functools

import jax
import jax.numpy as jnp
from jax.experimental import pallas as pl
from jax.experimental.pallas import tpu as pltpu


# ----------------------------- Pallas kernels ------------------------------


def embed_kernel(us_ref, um_ref, x_ref, cm_ref, csinv_ref, w_ref, cls_ref,
                 pos_ref, g_ref, b_ref, o_ref):
    """Preprocess + patch-embed + cls/pos + ln_pre for one batch element.

    x_ref is the im2col'd RAW image block (1, N, P) with P = C*patch*patch
    (the preprocess is elementwise per (b, c), so it commutes with the re-indexing).
    Output is padded to Tp rows; padded rows are zeros (masked later as attention keys).
    """
    b = pl.program_id(0)
    x = x_ref[0]                                      # (N, P) raw pixels, f32

    # UnNormalize quirk: reference zips over the BATCH dim -> per-batch scalar affine.
    y = x * us_ref[b] + um_ref[b]
    # ToPILImage -> uint8 (tensor.mul(255).byte()) -> ToTensor.
    # TODO(synk): .byte() wraparound for values outside [0,1] is not reproduced (we clamp),
    # and the PIL bicubic Resize/CenterCrop of clip.preprocess is skipped (host-side I/O).
    y = jnp.clip(y, 0.0, 1.0)
    y = jnp.floor(y * 255.0) * (1.0 / 255.0)
    y = (y - cm_ref[...]) * csinv_ref[...]            # CLIP Normalize (per-channel cols)

    # patch embedding (conv k=stride=patch, no bias) as a matmul: bf16 in, f32 accumulate.
    tok = jnp.dot(y.astype(jnp.bfloat16), w_ref[...],
                  preferred_element_type=jnp.float32)             # (N, D)

    n_tok = tok.shape[0]
    t_pad, d = pos_ref.shape
    pad_rows = t_pad - (n_tok + 1)
    seq = jnp.concatenate([cls_ref[...], tok], axis=0)            # (T, D)
    if pad_rows:
        seq = jnp.concatenate([seq, jnp.zeros((pad_rows, d), jnp.float32)], axis=0)
    seq = seq + pos_ref[...]                                      # (Tp, D)

    # ln_pre (f32)
    mu = jnp.mean(seq, axis=-1, keepdims=True)
    var = jnp.mean((seq - mu) ** 2, axis=-1, keepdims=True)
    o_ref[0] = (seq - mu) * jax.lax.rsqrt(var + 1e-5) * g_ref[...] + b_ref[...]


def transformer_kernel(x_ref, ln1g_ref, ln1b_ref, wqkv_ref, bqkv_ref, wo_ref, bo_ref,
                       ln2g_ref, ln2b_ref, w1_ref, b1_ref, w2_ref, b2_ref,
                       lnpg_ref, lnpb_ref, proj_ref,
                       feats_ref, h_ref, *, n_heads, t_real):
    """One grid step = one full transformer layer on a (Bt, Tp, D) batch tile.

    grid = (B/Bt, L).  The residual stream stays in VMEM scratch h_ref across the layer
    axis; stacked per-layer weights are pipelined by BlockSpec.  On the last layer the
    CLS head (ln_post + projection) is fused in and written to feats_ref.
    """
    layer = pl.program_id(1)
    n_layers = pl.num_programs(1)

    @pl.when(layer == 0)
    def _():
        h_ref[...] = x_ref[...]

    x = h_ref[...]                                    # (Bt, Tp, D) f32 residual stream
    bt, t_pad, d = x.shape
    hd = d // n_heads
    rows = bt * t_pad

    def layer_norm(v, g, b):
        mu = jnp.mean(v, axis=-1, keepdims=True)
        var = jnp.mean((v - mu) ** 2, axis=-1, keepdims=True)
        return (v - mu) * jax.lax.rsqrt(var + 1e-5) * g + b

    # ---------------- attention: LN1 -> QKV -> MHA -> out-proj -> +residual ------------
    xn = layer_norm(x, ln1g_ref[0], ln1b_ref[0])                   # (Bt, Tp, D) f32
    # 1/sqrt(head_dim) is pre-folded into the Q slice of wqkv AND bqkv.
    qkv = jnp.dot(xn.reshape(rows, d).astype(jnp.bfloat16), wqkv_ref[0],
                  preferred_element_type=jnp.float32) + bqkv_ref[0]   # (Bt*Tp, 3D)
    qkv = qkv.astype(jnp.bfloat16)

    # padded key positions (t_real <= Tp) get -inf scores
    kbias = jnp.where(
        jax.lax.broadcasted_iota(jnp.int32, (1, t_pad), 1) < t_real,
        0.0, -1e30).astype(jnp.float32)                            # (1, Tp)

    ctx_parts = []
    for bb in range(bt):                                           # static unroll, Bt small
        blk = qkv[bb * t_pad:(bb + 1) * t_pad]                     # (Tp, 3D)
        # reshape-based head split (no per-head stack/concat copies)
        q = blk[:, 0 * d:1 * d].reshape(t_pad, n_heads, hd).transpose(1, 0, 2)
        k = blk[:, 1 * d:2 * d].reshape(t_pad, n_heads, hd).transpose(1, 0, 2)
        v = blk[:, 2 * d:3 * d].reshape(t_pad, n_heads, hd).transpose(1, 0, 2)
        s = jnp.einsum('hqd,hkd->hqk', q, k,
                       preferred_element_type=jnp.float32)          # (H, Tp, Tp) f32
        s = s + kbias
        s = s - jnp.max(s, axis=-1, keepdims=True)
        p = jnp.exp(s)
        p = p * pl.reciprocal(jnp.sum(p, axis=-1, keepdims=True), approx=True)
        o = jnp.einsum('hqk,hkd->hqd', p.astype(jnp.bfloat16), v,
                       preferred_element_type=jnp.float32)           # (H, Tp, hd)
        ctx_parts.append(o.transpose(1, 0, 2).reshape(t_pad, d))     # (Tp, D)
    ctx = jnp.concatenate(ctx_parts, axis=0) if bt > 1 else ctx_parts[0]   # (Bt*Tp, D)

    attn = jnp.dot(ctx.astype(jnp.bfloat16), wo_ref[0],
                   preferred_element_type=jnp.float32) + bo_ref[0]
    x = x + attn.reshape(bt, t_pad, d)

    # ---------------- MLP: LN2 -> c_fc -> QuickGELU -> c_proj -> +residual -------------
    xn = layer_norm(x, ln2g_ref[0], ln2b_ref[0])
    hmid = jnp.dot(xn.reshape(rows, d).astype(jnp.bfloat16), w1_ref[0],
                   preferred_element_type=jnp.float32) + b1_ref[0]     # (Bt*Tp, 4D)
    hmid = hmid * (1.0 / (1.0 + jnp.exp(-1.702 * hmid)))               # QuickGELU, f32
    mlp = jnp.dot(hmid.astype(jnp.bfloat16), w2_ref[0],
                  preferred_element_type=jnp.float32) + b2_ref[0]      # (Bt*Tp, D)
    x = x + mlp.reshape(bt, t_pad, d)

    h_ref[...] = x                                    # residual stream stays in VMEM

    # ---------------- last layer: fused ln_post on CLS + final projection --------------
    @pl.when(layer == n_layers - 1)
    def _():
        cls = x[:, 0, :]                                             # (Bt, D)
        cls_n = layer_norm(cls, lnpg_ref[...], lnpb_ref[...])
        feats = jnp.dot(cls_n.astype(jnp.bfloat16), proj_ref[...],
                        preferred_element_type=jnp.float32)           # (Bt, out_dim)
        feats_ref[...] = feats.reshape(bt, 1, feats.shape[-1])


# ------------------------------ call wrappers -------------------------------

_VMEM_LIMIT = 64 * 1024 * 1024   # explicit scoped-VMEM budget (v5e default 16 MiB is too
                                 # small for real ViT-B MLP weights double-buffered)


def embed(xcols, un_scale, un_shift, cm_cols, csinv_cols, params, t_pad):
    B, N, P = xcols.shape
    D = params["conv_w_t"].shape[1]
    inv2 = lambda b: (0, 0)      # block-invariant 2-D weights: single-buffered
    return pl.pallas_call(
        embed_kernel,
        out_shape=jax.ShapeDtypeStruct((B, t_pad, D), jnp.float32),
        grid=(B,),
        in_specs=[
            pl.BlockSpec(memory_space=pltpu.MemorySpace.SMEM),            # un_scale (B,)
            pl.BlockSpec(memory_space=pltpu.MemorySpace.SMEM),            # un_shift (B,)
            pl.BlockSpec((1, N, P), lambda b: (b, 0, 0)),                 # raw pixels
            pl.BlockSpec((1, P), inv2, pipeline_mode=pl.Buffered(1)),     # clip mean
            pl.BlockSpec((1, P), inv2, pipeline_mode=pl.Buffered(1)),     # clip 1/std
            pl.BlockSpec((P, D), inv2, pipeline_mode=pl.Buffered(1)),     # conv weight
            pl.BlockSpec((1, D), inv2, pipeline_mode=pl.Buffered(1)),     # cls token
            pl.BlockSpec((t_pad, D), inv2, pipeline_mode=pl.Buffered(1)),  # pos emb
            pl.BlockSpec((1, D), inv2, pipeline_mode=pl.Buffered(1)),     # ln_pre g
            pl.BlockSpec((1, D), inv2, pipeline_mode=pl.Buffered(1)),     # ln_pre b
        ],
        out_specs=pl.BlockSpec((1, t_pad, D), lambda b: (b, 0, 0)),
        compiler_params=pltpu.CompilerParams(
            dimension_semantics=("parallel",),
            vmem_limit_bytes=_VMEM_LIMIT),
    )(un_scale, un_shift, xcols, cm_cols, csinv_cols,
      params["conv_w_t"], params["cls"], params["pos"],
      params["ln_pre_g"], params["ln_pre_b"])


def transformer_stack(h_emb, params, *, n_heads, t_real, batch_tile):
    B, t_pad, D = h_emb.shape
    L = params["wqkv"].shape[0]
    D3 = 3 * D
    Dh = params["w1"].shape[2]
    out_dim = params["proj"].shape[1]
    assert B % batch_tile == 0
    grid = (B // batch_tile, L)

    def lw(block):               # per-layer stacked weight: varies over the layer axis
        return pl.BlockSpec(block, lambda bi, l: (l, 0, 0))

    inv2 = lambda bi, l: (0, 0)  # grid-invariant head weights: single-buffered

    feats3 = pl.pallas_call(
        functools.partial(transformer_kernel, n_heads=n_heads, t_real=t_real),
        out_shape=jax.ShapeDtypeStruct((B, 1, out_dim), jnp.float32),
        grid=grid,
        in_specs=[
            pl.BlockSpec((batch_tile, t_pad, D), lambda bi, l: (bi, 0, 0)),   # tokens
            lw((1, 1, D)), lw((1, 1, D)),                                     # ln1 g/b
            lw((1, D, D3)), lw((1, 1, D3)),                                   # wqkv/bqkv
            lw((1, D, D)), lw((1, 1, D)),                                     # wo/bo
            lw((1, 1, D)), lw((1, 1, D)),                                     # ln2 g/b
            lw((1, D, Dh)), lw((1, 1, Dh)),                                   # w1/b1
            lw((1, Dh, D)), lw((1, 1, D)),                                    # w2/b2
            pl.BlockSpec((1, D), inv2, pipeline_mode=pl.Buffered(1)),         # ln_post g
            pl.BlockSpec((1, D), inv2, pipeline_mode=pl.Buffered(1)),         # ln_post b
            pl.BlockSpec((D, out_dim), inv2, pipeline_mode=pl.Buffered(1)),   # proj
        ],
        out_specs=pl.BlockSpec((batch_tile, 1, out_dim), lambda bi, l: (bi, 0, 0)),
        scratch_shapes=[pltpu.VMEM((batch_tile, t_pad, D), jnp.float32)],
        compiler_params=pltpu.CompilerParams(
            dimension_semantics=("parallel", "arbitrary"),
            vmem_limit_bytes=_VMEM_LIMIT),
    )(h_emb,
      params["ln1_g"], params["ln1_b"], params["wqkv"], params["bqkv"],
      params["wo"], params["bo"], params["ln2_g"], params["ln2_b"],
      params["w1"], params["b1"], params["w2"], params["b2"],
      params["ln_post_g"], params["ln_post_b"], params["proj"])
    return feats3.reshape(B, out_dim)


# ------------------------------ model + params ------------------------------


def init_params(key, *, C, patch, t_real, t_pad, width, n_heads, n_layers, out_dim):
    ks = iter(jax.random.split(key, 32))
    s = 0.02
    hd = width // n_heads
    scale = hd ** -0.5
    P = C * patch * patch

    def nrm(shape, dtype=jnp.float32):
        return (s * jax.random.normal(next(ks), shape)).astype(dtype)

    pos = jnp.zeros((t_pad, width), jnp.float32).at[:t_real].set(nrm((t_real, width)))

    # fold the 1/sqrt(head_dim) attention scale into the Q slice of BOTH wqkv and bqkv
    # (the same fold would be applied when loading real CLIP weights).
    wqkv = nrm((n_layers, width, 3 * width))
    wqkv = wqkv.at[:, :, :width].multiply(scale)
    bqkv = nrm((n_layers, 1, 3 * width))
    bqkv = bqkv.at[:, :, :width].multiply(scale)

    return {
        # matmul weights stored in bf16 (MXU-native inputs, f32 accumulation in-kernel)
        "conv_w_t": nrm((P, width), jnp.bfloat16),                    # (P, D)
        "cls": nrm((1, width)),
        "pos": pos,                                                   # (Tp, D), padded
        "ln_pre_g": jnp.ones((1, width), jnp.float32),
        "ln_pre_b": jnp.zeros((1, width), jnp.float32),
        # per-layer weights stacked along a leading L axis for the layer-gridded kernel
        "ln1_g": jnp.ones((n_layers, 1, width), jnp.float32),
        "ln1_b": jnp.zeros((n_layers, 1, width), jnp.float32),
        "wqkv": wqkv.astype(jnp.bfloat16),                            # (L, D, 3D)
        "bqkv": bqkv,                                                 # (L, 1, 3D) f32
        "wo": nrm((n_layers, width, width), jnp.bfloat16),
        "bo": nrm((n_layers, 1, width)),
        "ln2_g": jnp.ones((n_layers, 1, width), jnp.float32),
        "ln2_b": jnp.zeros((n_layers, 1, width), jnp.float32),
        "w1": nrm((n_layers, width, 4 * width), jnp.bfloat16),
        "b1": nrm((n_layers, 1, 4 * width)),
        "w2": nrm((n_layers, 4 * width, width), jnp.bfloat16),
        "b2": nrm((n_layers, 1, width)),
        "ln_post_g": jnp.ones((1, width), jnp.float32),
        "ln_post_b": jnp.zeros((1, width), jnp.float32),
        "proj": nrm((width, out_dim), jnp.bfloat16),
    }


def image_encoder_forward(x, params, *, patch, n_heads, batch_tile):
    B, C, H, W = x.shape
    Hp, Wp = H // patch, W // patch
    N = Hp * Wp
    P = C * patch * patch
    t_real = N + 1
    t_pad = params["pos"].shape[0]

    # --- UnNormalize constants (batch-dim quirk) and CLIP Normalize constants ---
    un_mean = jnp.array([0.485, 0.456, 0.406], jnp.float32)
    un_std = jnp.array([0.229, 0.224, 0.225], jnp.float32)
    nq = min(B, 3)
    un_scale = jnp.ones((B,), jnp.float32).at[:nq].set(un_std[:nq])   # SMEM scalars
    un_shift = jnp.zeros((B,), jnp.float32).at[:nq].set(un_mean[:nq])

    clip_mean = jnp.array([0.48145466, 0.4578275, 0.40821073], jnp.float32)
    clip_std = jnp.array([0.26862954, 0.26130258, 0.27577711], jnp.float32)
    cm_cols = jnp.repeat(clip_mean, patch * patch).reshape(1, P)
    csinv_cols = jnp.repeat(1.0 / clip_std, patch * patch).reshape(1, P)

    # --- im2col of the raw pixels (elementwise preprocess commutes with this) ---
    # TODO(synk): at real 224x224 this XLA transpose is one extra HBM pass; it could be
    # folded into the embed kernel's DMA with a (B, Hp) patch-row grid instead.
    xcols = x.reshape(B, C, Hp, patch, Wp, patch).transpose(0, 2, 4, 1, 3, 5)
    xcols = xcols.reshape(B, N, P)

    # --- fused preprocess + patch-embed + cls/pos + ln_pre ---
    h = embed(xcols, un_scale, un_shift, cm_cols, csinv_cols, params, t_pad)  # (B,Tp,D)

    # --- single layer-gridded pallas_call: all blocks + ln_post + projection ---
    feats = transformer_stack(h, params, n_heads=n_heads, t_real=t_real,
                              batch_tile=batch_tile)
    return feats                                                      # (B, out_dim) f32


# ---------------------------------- main ------------------------------------

if __name__ == "__main__":
    # small synthetic sizes consistent with the ViT image tower; D, 3D, 4D and out_dim are
    # lane-dense (multiples of 128) and T is padded to a multiple of 16 so every matmul
    # operand / store is unmasked.
    B, C, H, W = 4, 3, 32, 32
    PATCH = 8
    WIDTH = 256            # stand-in for ViT-B's 768 (small, lane-dense)
    HEADS = 2
    LAYERS = 2
    OUT_DIM = 256          # stand-in for the module's dimension=512 (small, lane-dense)
    BATCH_TILE = 2         # images per grid step (fills MXU rows, amortizes step overhead)

    T_REAL = 1 + (H // PATCH) * (W // PATCH)          # 17 tokens
    T_PAD = -(-T_REAL // 16) * 16                     # 32 (bf16-operand friendly)

    key = jax.random.PRNGKey(0)
    k_x, k_p = jax.random.split(key)
    x = jax.random.uniform(k_x, (B, C, H, W), dtype=jnp.float32)

    params = init_params(
        k_p,
        C=C,
        patch=PATCH,
        t_real=T_REAL,
        t_pad=T_PAD,
        width=WIDTH,
        n_heads=HEADS,
        n_layers=LAYERS,
        out_dim=OUT_DIM,
    )

    feats = image_encoder_forward(x, params, patch=PATCH, n_heads=HEADS,
                                  batch_tile=BATCH_TILE)
    feats = jax.block_until_ready(feats)
    assert feats.shape == (B, OUT_DIM) and feats.dtype == jnp.float32
    assert bool(jnp.all(jnp.isfinite(feats)))
    print("KERNEL_OK")
</pallas_src>

<mosaic_0001>
module attributes {stable_mosaic.version = 11 : i64} {
  func.func @embed_kernel(%arg0: i32, %arg1: memref<4xf32, #tpu.memory_space<smem>>, %arg2: memref<4xf32, #tpu.memory_space<smem>>, %arg3: memref<1x16x192xf32, #tpu.memory_space<vmem>>, %arg4: memref<1x192xf32, #tpu.memory_space<vmem>>, %arg5: memref<1x192xf32, #tpu.memory_space<vmem>>, %arg6: memref<192x256xbf16, #tpu.memory_space<vmem>>, %arg7: memref<1x256xf32, #tpu.memory_space<vmem>>, %arg8: memref<32x256xf32, #tpu.memory_space<vmem>>, %arg9: memref<1x256xf32, #tpu.memory_space<vmem>>, %arg10: memref<1x256xf32, #tpu.memory_space<vmem>>, %arg11: memref<1x32x256xf32, #tpu.memory_space<vmem>>) attributes {dimension_semantics = [#tpu.dimension_semantics<parallel>], iteration_bounds = array<i64: 4>, scalar_prefetch = 0 : i64, scratch_operands = 0 : i64, tpu.core_type = #tpu.core_type<tc>, window_params = [{transform_indices = @transform_0, window_bounds = array<i64: 4>}, {transform_indices = @transform_1, window_bounds = array<i64: 4>}, {transform_indices = @transform_2, window_bounds = array<i64: 1, 16, 192>}, {pipeline_mode = #tpu.pipeline_mode<synchronous>, transform_indices = @transform_3, window_bounds = array<i64: 1, 192>}, {pipeline_mode = #tpu.pipeline_mode<synchronous>, transform_indices = @transform_4, window_bounds = array<i64: 1, 192>}, {pipeline_mode = #tpu.pipeline_mode<synchronous>, transform_indices = @transform_5, window_bounds = array<i64: 192, 256>}, {pipeline_mode = #tpu.pipeline_mode<synchronous>, transform_indices = @transform_6, window_bounds = array<i64: 1, 256>}, {pipeline_mode = #tpu.pipeline_mode<synchronous>, transform_indices = @transform_7, window_bounds = array<i64: 32, 256>}, {pipeline_mode = #tpu.pipeline_mode<synchronous>, transform_indices = @transform_8, window_bounds = array<i64: 1, 256>}, {pipeline_mode = #tpu.pipeline_mode<synchronous>, transform_indices = @transform_9, window_bounds = array<i64: 1, 256>}, {transform_indices = @transform_10, window_bounds = array<i64: 1, 32, 256>}]} {
    %c0 = arith.constant 0 : index
    %c0_0 = arith.constant 0 : index
    %c0_1 = arith.constant 0 : index
    %0 = vector.load %arg3[%c0, %c0_0, %c0_1] : memref<1x16x192xf32, #tpu.memory_space<vmem>>, vector<1x16x192xf32>
    %1 = vector.shape_cast %0 : vector<1x16x192xf32> to vector<16x192xf32>
    %2 = arith.index_cast %arg0 : i32 to index
    %3 = memref.load %arg1[%2] : memref<4xf32, #tpu.memory_space<smem>>
    %4 = vector.broadcast %3 : f32 to vector<16x192xf32>
    %5 = arith.mulf %1, %4 : vector<16x192xf32>
    %6 = arith.index_cast %arg0 : i32 to index
    %7 = memref.load %arg2[%6] : memref<4xf32, #tpu.memory_space<smem>>
    %8 = vector.broadcast %7 : f32 to vector<16x192xf32>
    %9 = arith.addf %5, %8 : vector<16x192xf32>
    %cst = arith.constant 0.000000e+00 : f32
    %cst_2 = arith.constant 1.000000e+00 : f32
    %10 = vector.broadcast %cst : f32 to vector<16x192xf32>
    %11 = arith.maximumf %10, %9 : vector<16x192xf32>
    %12 = vector.broadcast %cst_2 : f32 to vector<16x192xf32>
    %13 = arith.minimumf %12, %11 : vector<16x192xf32>
    %cst_3 = arith.constant 2.550000e+02 : f32
    %14 = vector.broadcast %cst_3 : f32 to vector<16x192xf32>
    %15 = arith.mulf %13, %14 : vector<16x192xf32>
    %16 = math.floor %15 : vector<16x192xf32>
    %cst_4 = arith.constant 0.00392156886 : f32
    %17 = vector.broadcast %cst_4 : f32 to vector<16x192xf32>
    %18 = arith.mulf %16, %17 : vector<16x192xf32>
    %c0_5 = arith.constant 0 : index
    %c0_6 = arith.constant 0 : index
    %19 = vector.load %arg4[%c0_5, %c0_6] : memref<1x192xf32, #tpu.memory_space<vmem>>, vector<1x192xf32>
    %20 = vector.broadcast %19 : vector<1x192xf32> to vector<16x192xf32>
    %21 = arith.subf %18, %20 : vector<16x192xf32>
    %c0_7 = arith.constant 0 : index
    %c0_8 = arith.constant 0 : index
    %22 = vector.load %arg5[%c0_7, %c0_8] : memref<1x192xf32, #tpu.memory_space<vmem>>, vector<1x192xf32>
    %23 = vector.broadcast %22 : vector<1x192xf32> to vector<16x192xf32>
    %24 = arith.mulf %21, %23 : vector<16x192xf32>
    %25 = arith.truncf %24 : vector<16x192xf32> to vector<16x192xbf16>
    %c0_9 = arith.constant 0 : index
    %c0_10 = arith.constant 0 : index
    %26 = vector.load %arg6[%c0_9, %c0_10] : memref<192x256xbf16, #tpu.memory_space<vmem>>, vector<192x256xbf16>
    %cst_11 = arith.constant dense<0.000000e+00> : vector<16x256xf32>
    %27 = tpu.matmul %25, %26, %cst_11 {dimension_numbers = #tpu.dot_dimension_numbers<[1], [0], [0], [1], [0, 0, 1, 1], [], []>} : vector<16x192xbf16>, vector<192x256xbf16>, vector<16x256xf32> -> vector<16x256xf32>
    %c0_12 = arith.constant 0 : index
    %c0_13 = arith.constant 0 : index
    %28 = vector.load %arg7[%c0_12, %c0_13] : memref<1x256xf32, #tpu.memory_space<vmem>>, vector<1x256xf32>
    %29 = tpu.concatenate %28, %27 in 0 : vector<1x256xf32>, vector<16x256xf32> -> vector<17x256xf32>
    %cst_14 = arith.constant 0.000000e+00 : f32
    %30 = vector.broadcast %cst_14 : f32 to vector<15x256xf32>
    %31 = tpu.concatenate %29, %30 in 0 : vector<17x256xf32>, vector<15x256xf32> -> vector<32x256xf32>
    %c0_15 = arith.constant 0 : index
    %c0_16 = arith.constant 0 : index
    %32 = vector.load %arg8[%c0_15, %c0_16] : memref<32x256xf32, #tpu.memory_space<vmem>>, vector<32x256xf32>
    %33 = arith.addf %31, %32 : vector<32x256xf32>
    %cst_17 = arith.constant dense<0.000000e+00> : vector<32xf32>
    %34 = vector.multi_reduction <add>, %33, %cst_17 [1] : vector<32x256xf32> to vector<32xf32>
    %35 = vector.shape_cast %34 : vector<32xf32> to vector<32x1xf32>
    %cst_18 = arith.constant 2.560000e+02 : f32
    %36 = vector.broadcast %cst_18 : f32 to vector<32x1xf32>
    %37 = arith.divf %35, %36 : vector<32x1xf32>
    %38 = vector.broadcast %37 : vector<32x1xf32> to vector<32x256xf32>
    %39 = arith.subf %33, %38 : vector<32x256xf32>
    %40 = arith.mulf %39, %39 : vector<32x256xf32>
    %cst_19 = arith.constant dense<0.000000e+00> : vector<32xf32>
    %41 = vector.multi_reduction <add>, %40, %cst_19 [1] : vector<32x256xf32> to vector<32xf32>
    %42 = vector.shape_cast %41 : vector<32xf32> to vector<32x1xf32>
    %cst_20 = arith.constant 2.560000e+02 : f32
    %43 = vector.broadcast %cst_20 : f32 to vector<32x1xf32>
    %44 = arith.divf %42, %43 : vector<32x1xf32>
    %45 = vector.broadcast %37 : vector<32x1xf32> to vector<32x256xf32>
    %46 = arith.subf %33, %45 : vector<32x256xf32>
    %cst_21 = arith.constant 9.99999974E-6 : f32
    %47 = vector.broadcast %cst_21 : f32 to vector<32x1xf32>
    %48 = arith.addf %44, %47 : vector<32x1xf32>
    %49 = math.rsqrt %48 : vector<32x1xf32>
    %50 = vector.broadcast %49 : vector<32x1xf32> to vector<32x256xf32>
    %51 = arith.mulf %46, %50 : vector<32x256xf32>
    %c0_22 = arith.constant 0 : index
    %c0_23 = arith.constant 0 : index
    %52 = vector.load %arg9[%c0_22, %c0_23] : memref<1x256xf32, #tpu.memory_space<vmem>>, vector<1x256xf32>
    %53 = vector.broadcast %52 : vector<1x256xf32> to vector<32x256xf32>
    %54 = arith.mulf %51, %53 : vector<32x256xf32>
    %c0_24 = arith.constant 0 : index
    %c0_25 = arith.constant 0 : index
    %55 = vector.load %arg10[%c0_24, %c0_25] : memref<1x256xf32, #tpu.memory_space<vmem>>, vector<1x256xf32>
    %56 = vector.broadcast %55 : vector<1x256xf32> to vector<32x256xf32>
    %57 = arith.addf %54, %56 : vector<32x256xf32>
    %c0_26 = arith.constant 0 : index
    %c0_27 = arith.constant 0 : index
    %c0_28 = arith.constant 0 : index
    %58 = vector.load %arg11[%c0_26, %c0_27, %c0_28] : memref<1x32x256xf32, #tpu.memory_space<vmem>>, vector<1x32x256xf32>
    %59 = vector.shape_cast %58 : vector<1x32x256xf32> to vector<32x256xf32>
    %60 = vector.shape_cast %57 : vector<32x256xf32> to vector<1x32x256xf32>
    tpu.vector_store %arg11[%c0_26, %c0_27, %c0_28], %60 {strides = array<i32>} : memref<1x32x256xf32, #tpu.memory_space<vmem>>, vector<1x32x256xf32>,
    return
  }
  func.func @transform_0(%arg0: i32) -> i32 {
    %c0_i32 = arith.constant 0 : i32
    %c0_i32_0 = arith.constant 0 : i32
    return %c0_i32 : i32
  }
  func.func @transform_1(%arg0: i32) -> i32 {
    %c0_i32 = arith.constant 0 : i32
    %c0_i32_0 = arith.constant 0 : i32
    return %c0_i32 : i32
  }
  func.func @transform_2(%arg0: i32) -> (i32, i32, i32) {
    %c0_i32 = arith.constant 0 : i32
    %c0_i32_0 = arith.constant 0 : i32
    %c0_i32_1 = arith.constant 0 : i32
    return %arg0, %c0_i32, %c0_i32_0 : i32, i32, i32
  }
  func.func @transform_3(%arg0: i32) -> (i32, i32) {
    %c0_i32 = arith.constant 0 : i32
    %c0_i32_0 = arith.constant 0 : i32
    %c0_i32_1 = arith.constant 0 : i32
    return %c0_i32, %c0_i32_0 : i32, i32
  }
  func.func @transform_4(%arg0: i32) -> (i32, i32) {
    %c0_i32 = arith.constant 0 : i32
    %c0_i32_0 = arith.constant 0 : i32
    %c0_i32_1 = arith.constant 0 : i32
    return %c0_i32, %c0_i32_0 : i32, i32
  }
  func.func @transform_5(%arg0: i32) -> (i32, i32) {
    %c0_i32 = arith.constant 0 : i32
    %c0_i32_0 = arith.constant 0 : i32
    %c0_i32_1 = arith.constant 0 : i32
    return %c0_i32, %c0_i32_0 : i32, i32
  }
  func.func @transform_6(%arg0: i32) -> (i32, i32) {
    %c0_i32 = arith.constant 0 : i32
    %c0_i32_0 = arith.constant 0 : i32
    %c0_i32_1 = arith.constant 0 : i32
    return %c0_i32, %c0_i32_0 : i32, i32
  }
  func.func @transform_7(%arg0: i32) -> (i32, i32) {
    %c0_i32 = arith.constant 0 : i32
    %c0_i32_0 = arith.constant 0 : i32
    %c0_i32_1 = arith.constant 0 : i32
    return %c0_i32, %c0_i32_0 : i32, i32
  }
  func.func @transform_8(%arg0: i32) -> (i32, i32) {
    %c0_i32 = arith.constant 0 : i32
    %c0_i32_0 = arith.constant 0 : i32
    %c0_i32_1 = arith.constant 0 : i32
    return %c0_i32, %c0_i32_0 : i32, i32
  }
  func.func @transform_9(%arg0: i32) -> (i32, i32) {
    %c0_i32 = arith.constant 0 : i32
    %c0_i32_0 = arith.constant 0 : i32
    %c0_i32_1 = arith.constant 0 : i32
    return %c0_i32, %c0_i32_0 : i32, i32
  }
  func.func @transform_10(%arg0: i32) -> (i32, i32, i32) {
    %c0_i32 = arith.constant 0 : i32
    %c0_i32_0 = arith.constant 0 : i32
    %c0_i32_1 = arith.constant 0 : i32
    return %arg0, %c0_i32, %c0_i32_0 : i32, i32, i32
  }
}

</mosaic_0001>

<llo_original>
// kernel: tpu_custom_call.1
$region0: #{tpu_custom_call.1}
  #allocation0 [shape = 'u32[]', space=smem, size = 0x4, offset = 0x4, fixed_abs, tag = 'smem constant byte address 0x4 - core index']
  #allocation1 [shape = 'u32[144,128]{1,0:T(1,128)}', space=vmem, size = 0x12000, scoped, tag = 'internal scratch']
  %s0 = inlined_call_operand.hbm [shape: f32[4], index: 0, kind: input, shape index: {}]
  %s1 = inlined_call_operand.hbm [shape: f32[4], index: 1, kind: input, shape index: {}]
  %s2 = inlined_call_operand.hbm [shape: f32[4,16,192], index: 2, kind: input, shape index: {}]
  %s3 = inlined_call_operand.hbm [shape: f32[1,192], index: 3, kind: input, shape index: {}]
  %s4 = inlined_call_operand.hbm [shape: f32[1,192], index: 4, kind: input, shape index: {}]
  %s5 = inlined_call_operand.hbm [shape: bf16[192,256], index: 5, kind: input, shape index: {}]
  %s6 = inlined_call_operand.hbm [shape: f32[1,256], index: 6, kind: input, shape index: {}]
  %s7 = inlined_call_operand.hbm [shape: f32[32,256], index: 7, kind: input, shape index: {}]
  %s8 = inlined_call_operand.hbm [shape: f32[1,256], index: 8, kind: input, shape index: {}]
  %s9 = inlined_call_operand.hbm [shape: f32[1,256], index: 9, kind: input, shape index: {}]
  %s10 = inlined_call_operand.hbm [shape: f32[4,32,256], index: 10, kind: output, shape index: {}]
  %s11 = sld [smem:[#allocation0]]
  $region113: #{tpu_custom_call.1} parent=0
    _
  %s13 = ssub.s32 1, %s11
  %s14 = scalar_select 0, %s13, %s11
  $region1: #{tpu_custom_call.1} parent=0
    #allocation2 [shape = 'u8[512]{0}', space=smem, size = 0x200, scoped, tag = 'input window, operand 0, single buffered']
    #allocation3 [shape = 's32[2]{0}', space=sflag, size = 0x8, scoped, tag = 'scoped memory for tpu_custom_call.1']
    #allocation4 [shape = 's32[2]{0}', space=sflag, size = 0x8, scoped, tag = 'scoped memory for tpu_custom_call.1']
    #allocation5 [shape = 's32[2]{0}', space=sflag, size = 0x8, scoped, tag = 'scoped memory for tpu_custom_call.1']
    #allocation6 [shape = 'u8[512]{0}', space=smem, size = 0x200, scoped, tag = 'input window, operand 1, single buffered']
    #allocation7 [shape = 's32[1]{0}', space=sflag, size = 0x4, scoped, tag = 'scoped memory for tpu_custom_call.1']
    #allocation8 [shape = 'u8[32768]{0}', space=vmem, size = 0x8000, scoped, tag = 'input window, operand 2']
    #allocation9 [shape = 'u8[1024]{0}', space=vmem, size = 0x400, scoped, tag = 'input window, operand 3, single buffered']
    #allocation10 [shape = 's32[1]{0}', space=sflag, size = 0x4, scoped, tag = 'scoped memory for tpu_custom_call.1']
    #allocation11 [shape = 'u8[1024]{0}', space=vmem, size = 0x400, scoped, tag = 'input window, operand 4, single buffered']
    #allocation12 [shape = 'u8[98304]{0}', space=vmem, size = 0x18000, scoped, tag = 'input window, operand 5, single buffered']
    #allocation13 [shape = 's32[1]{0}', space=sflag, size = 0x4, scoped, tag = 'scoped memory for tpu_custom_call.1']
    #allocation14 [shape = 'u8[1024]{0}', space=vmem, size = 0x400, scoped, tag = 'input window, operand 6, single buffered']
    #allocation15 [shape = 'u8[32768]{0}', space=vmem, size = 0x8000, scoped, tag = 'input window, operand 7, single buffered']
    #allocation16 [shape = 's32[1]{0}', space=sflag, size = 0x4, scoped, tag = 'scoped memory for tpu_custom_call.1']
    #allocation17 [shape = 'u8[1024]{0}', space=vmem, size = 0x400, scoped, tag = 'input window, operand 8, single buffered']
    #allocation18 [shape = 'u8[1024]{0}', space=vmem, size = 0x400, scoped, tag = 'input window, operand 9, single buffered']
    #allocation19 [shape = 's32[1]{0}', space=sflag, size = 0x4, scoped, tag = 'scoped memory for tpu_custom_call.1']
    #allocation20 [shape = 'u8[65536]{0}', space=vmem, size = 0x10000, scoped, tag = 'output window, operand 0']
    %15 = vsyncpa [#allocation5], 0
    %16 = vsyncpa [#allocation7], 0
    %17 = vsyncpa [#allocation3], 0
    %s18 = scalar_lea.sflag [#allocation3], 1
    %19 = vsyncpa %s18, 0
    %20 = vsyncpa [#allocation10], 0
    %21 = vsyncpa [#allocation13], 0
    %22 = vsyncpa [#allocation16], 0
    %23 = vsyncpa [#allocation19], 0
    %24 = vsyncpa [#allocation4], 0
    %s25 = scalar_lea.sflag [#allocation4], 1
    %26 = vsyncpa %s25, 0
    loop: start=0, step=1, limit=6
    $region2: #{tpu_custom_call.1} parent=1 // loop_pre_header
      _
    $region3: #{tpu_custom_call.1} parent=1 // loop_header
      %s28 = sphi 0, %s32
      %p29 = scmp.ge.s32.totalorder %s28, 6
      %s36 = sphi 0, %s36
      %s38 = sphi 0, %s36
      %s39 = sphi 0, %s38
      %s53 = sphi 0, %s39
      %s57 = sphi 0, %s57
      %s59 = sphi 0, %s57
      %s60 = sphi 0, %s59
      %s74 = sphi 0, %s60
      %s80 = sphi 0, %s82
      %s83 = sphi 0, %s80
      %s84 = sphi 0, %s83
      %s100 = sphi 0, %s84
      %s104 = sphi 0, %s104
      %s106 = sphi 0, %s104
      %s107 = sphi 0, %s106
      %s121 = sphi 0, %s107
      %s125 = sphi 0, %s125
      %s127 = sphi 0, %s125
      %s128 = sphi 0, %s127
      %s142 = sphi 0, %s128
      %s146 = sphi 0, %s146
      %s148 = sphi 0, %s146
      %s149 = sphi 0, %s148
      %s163 = sphi 0, %s149
      %s167 = sphi 0, %s167
      %s169 = sphi 0, %s167
      %s170 = sphi 0, %s169
      %s184 = sphi 0, %s170
      %s188 = sphi 0, %s188
      %s190 = sphi 0, %s188
      %s191 = sphi 0, %s190
      %s205 = sphi 0, %s191
      %s209 = sphi 0, %s209
      %s211 = sphi 0, %s209
      %s212 = sphi 0, %s211
      %s226 = sphi 0, %s212
      %s230 = sphi 0, %s230
      %s232 = sphi 0, %s230
      %s233 = sphi 0, %s232
      %s247 = sphi 0, %s233
      %s253 = sphi 0, %s255
      %s256 = sphi 0, %s253
      %s257 = sphi 0, %s256
      %s273 = sphi 0, %s257
    $region4: #{tpu_custom_call.1} parent=1 // loop_header_branch
      %31 = sbr.rel (%p29) target = $region8
    $region5: #{tpu_custom_call.1} parent=1 // loop_body
      %s33 = ssub.s32 %s28, 1
      %s34 = ssub.s32 %s28, 2
      %s35 = sadd.s32 %s28, 1
      %s37 = sadd.s32 %s36, 1
      %p40 = scmp.eq.s32.totalorder %s28, 3
      %p41 = scmp.ne.s32.totalorder %s36, %s38
      %p42 = scmp.eq.s32.totalorder %s28, 0
      %p43 = por %p41, %p42
      %p44 = scmp.ne.s32.totalorder %s36, %s38
      %p45 = scmp.eq.s32.totalorder %s33, 3
      %p46 = por %p44, %p45
      %p47 = scmp.ne.s32.totalorder %s38, %s39
      %p48 = scmp.eq.s32.totalorder %s33, 0
      %p49 = por %p47, %p48
      %p50 = scmp.ne.s32.totalorder %s38, %s39
      %p51 = scmp.eq.s32.totalorder %s34, 3
      %p52 = por %p50, %p51
      %p54 = scmp.ne.s32.totalorder %s39, %s53
      %p55 = scmp.eq.s32.totalorder %s34, 0
      %p56 = por %p54, %p55
      %s58 = sadd.s32 %s57, 1
      %p61 = scmp.eq.s32.totalorder %s28, 3
      %p62 = scmp.ne.s32.totalorder %s57, %s59
      %p63 = scmp.eq.s32.totalorder %s28, 0
      %p64 = por %p62, %p63
      %p65 = scmp.ne.s32.totalorder %s57, %s59
      %p66 = scmp.eq.s32.totalorder %s33, 3
      %p67 = por %p65, %p66
      %p68 = scmp.ne.s32.totalorder %s59, %s60
      %p69 = scmp.eq.s32.totalorder %s33, 0
      %p70 = por %p68, %p69
      %p71 = scmp.ne.s32.totalorder %s59, %s60
      %p72 = scmp.eq.s32.totalorder %s34, 3
      %p73 = por %p71, %p72
      %p75 = scmp.ne.s32.totalorder %s60, %s74
      %p76 = scmp.eq.s32.totalorder %s34, 0
      %p77 = por %p75, %p76
      %s78 = ssub.s32 %s28, %s35
      %p79 = scmp.eq.s32.totalorder %s78, 0
      %s81 = sadd.s32 %s80, 1
      %s82 = scalar_select %p79, %s80, %s81
      %p85 = pneg %p79
      %p86 = scmp.eq.s32.totalorder %s28, 3
      %p87 = por %p85, %p86
      %p88 = scmp.ne.s32.totalorder %s80, %s83
      %p89 = scmp.eq.s32.totalorder %s28, 0
      %p90 = por %p88, %p89
      %p91 = scmp.ne.s32.totalorder %s80, %s83
      %p92 = scmp.eq.s32.totalorder %s33, 3
      %p93 = por %p91, %p92
      %p94 = scmp.ne.s32.totalorder %s83, %s84
      %p95 = scmp.eq.s32.totalorder %s33, 0
      %p96 = por %p94, %p95
      %p97 = scmp.ne.s32.totalorder %s83, %s84
      %p98 = scmp.eq.s32.totalorder %s34, 3
      %p99 = por %p97, %p98
      %p101 = scmp.ne.s32.totalorder %s84, %s100
      %p102 = scmp.eq.s32.totalorder %s34, 0
      %p103 = por %p101, %p102
      %s105 = sadd.s32 %s104, 1
      %p108 = scmp.eq.s32.totalorder %s28, 3
      %p109 = scmp.ne.s32.totalorder %s104, %s106
      %p110 = scmp.eq.s32.totalorder %s28, 0
      %p111 = por %p109, %p110
      %p112 = scmp.ne.s32.totalorder %s104, %s106
      %p113 = scmp.eq.s32.totalorder %s33, 3
      %p114 = por %p112, %p113
      %p115 = scmp.ne.s32.totalorder %s106, %s107
      %p116 = scmp.eq.s32.totalorder %s33, 0
      %p117 = por %p115, %p116
      %p118 = scmp.ne.s32.totalorder %s106, %s107
      %p119 = scmp.eq.s32.totalorder %s34, 3
      %p120 = por %p118, %p119
      %p122 = scmp.ne.s32.totalorder %s107, %s121
      %p123 = scmp.eq.s32.totalorder %s34, 0
      %p124 = por %p122, %p123
      %s126 = sadd.s32 %s125, 1
      %p129 = scmp.eq.s32.totalorder %s28, 3
      %p130 = scmp.ne.s32.totalorder %s125, %s127
      %p131 = scmp.eq.s32.totalorder %s28, 0
      %p132 = por %p130, %p131
      %p133 = scmp.ne.s32.totalorder %s125, %s127
      %p134 = scmp.eq.s32.totalorder %s33, 3
      %p135 = por %p133, %p134
      %p136 = scmp.ne.s32.totalorder %s127, %s128
      %p137 = scmp.eq.s32.totalorder %s33, 0
      %p138 = por %p136, %p137
      %p139 = scmp.ne.s32.totalorder %s127, %s128
      %p140 = scmp.eq.s32.totalorder %s34, 3
      %p141 = por %p139, %p140
      %p143 = scmp.ne.s32.totalorder %s128, %s142
      %p144 = scmp.eq.s32.totalorder %s34, 0
      %p145 = por %p143, %p144
      %s147 = sadd.s32 %s146, 1
      %p150 = scmp.eq.s32.totalorder %s28, 3
      %p151 = scmp.ne.s32.totalorder %s146, %s148
      %p152 = scmp.eq.s32.totalorder %s28, 0
      %p153 = por %p151, %p152
      %p154 = scmp.ne.s32.totalorder %s146, %s148
      %p155 = scmp.eq.s32.totalorder %s33, 3
      %p156 = por %p154, %p155
      %p157 = scmp.ne.s32.totalorder %s148, %s149
      %p158 = scmp.eq.s32.totalorder %s33, 0
      %p159 = por %p157, %p158
      %p160 = scmp.ne.s32.totalorder %s148, %s149
      %p161 = scmp.eq.s32.totalorder %s34, 3
      %p162 = por %p160, %p161
      %p164 = scmp.ne.s32.totalorder %s149, %s163
      %p165 = scmp.eq.s32.totalorder %s34, 0
      %p166 = por %p164, %p165
      %s168 = sadd.s32 %s167, 1
      %p171 = scmp.eq.s32.totalorder %s28, 3
      %p172 = scmp.ne.s32.totalorder %s167, %s169
      %p173 = scmp.eq.s32.totalorder %s28, 0
      %p174 = por %p172, %p173
      %p175 = scmp.ne.s32.totalorder %s167, %s169
      %p176 = scmp.eq.s32.totalorder %s33, 3
      %p177 = por %p175, %p176
      %p178 = scmp.ne.s32.totalorder %s169, %s170
      %p179 = scmp.eq.s32.totalorder %s33, 0
      %p180 = por %p178, %p179
      %p181 = scmp.ne.s32.totalorder %s169, %s170
      %p182 = scmp.eq.s32.totalorder %s34, 3
      %p183 = por %p181, %p182
      %p185 = scmp.ne.s32.totalorder %s170, %s184
      %p186 = scmp.eq.s32.totalorder %s34, 0
      %p187 = por %p185, %p186
      %s189 = sadd.s32 %s188, 1
      %p192 = scmp.eq.s32.totalorder %s28, 3
      %p193 = scmp.ne.s32.totalorder %s188, %s190
      %p194 = scmp.eq.s32.totalorder %s28, 0
      %p195 = por %p193, %p194
      %p196 = scmp.ne.s32.totalorder %s188, %s190
      %p197 = scmp.eq.s32.totalorder %s33, 3
      %p198 = por %p196, %p197
      %p199 = scmp.ne.s32.totalorder %s190, %s191
      %p200 = scmp.eq.s32.totalorder %s33, 0
      %p201 = por %p199, %p200
      %p202 = scmp.ne.s32.totalorder %s190, %s191
      %p203 = scmp.eq.s32.totalorder %s34, 3
      %p204 = por %p202, %p203
      %p206 = scmp.ne.s32.totalorder %s191, %s205
      %p207 = scmp.eq.s32.totalorder %s34, 0
      %p208 = por %p206, %p207
      %s210 = sadd.s32 %s209, 1
      %p213 = scmp.eq.s32.totalorder %s28, 3
      %p214 = scmp.ne.s32.totalorder %s209, %s211
      %p215 = scmp.eq.s32.totalorder %s28, 0
      %p216 = por %p214, %p215
      %p217 = scmp.ne.s32.totalorder %s209, %s211
      %p218 = scmp.eq.s32.totalorder %s33, 3
      %p219 = por %p217, %p218
      %p220 = scmp.ne.s32.totalorder %s211, %s212
      %p221 = scmp.eq.s32.totalorder %s33, 0
      %p222 = por %p220, %p221
      %p223 = scmp.ne.s32.totalorder %s211, %s212
      %p224 = scmp.eq.s32.totalorder %s34, 3
      %p225 = por %p223, %p224
      %p227 = scmp.ne.s32.totalorder %s212, %s226
      %p228 = scmp.eq.s32.totalorder %s34, 0
      %p229 = por %p227, %p228
      %s231 = sadd.s32 %s230, 1
      %p234 = scmp.eq.s32.totalorder %s28, 3
      %p235 = scmp.ne.s32.totalorder %s230, %s232
      %p236 = scmp.eq.s32.totalorder %s28, 0
      %p237 = por %p235, %p236
      %p238 = scmp.ne.s32.totalorder %s230, %s232
      %p239 = scmp.eq.s32.totalorder %s33, 3
      %p240 = por %p238, %p239
      %p241 = scmp.ne.s32.totalorder %s232, %s233
      %p242 = scmp.eq.s32.totalorder %s33, 0
      %p243 = por %p241, %p242
      %p244 = scmp.ne.s32.totalorder %s232, %s233
      %p245 = scmp.eq.s32.totalorder %s34, 3
      %p246 = por %p244, %p245
      %p248 = scmp.ne.s32.totalorder %s233, %s247
      %p249 = scmp.eq.s32.totalorder %s34, 0
      %p250 = por %p248, %p249
      %s251 = ssub.s32 %s28, %s35
      %p252 = scmp.eq.s32.totalorder %s251, 0
      %s254 = sadd.s32 %s253, 1
      %s255 = scalar_select %p252, %s253, %s254
      %p258 = pneg %p252
      %p259 = scmp.eq.s32.totalorder %s28, 3
      %p260 = por %p258, %p259
      %p261 = scmp.ne.s32.totalorder %s253, %s256
      %p262 = scmp.eq.s32.totalorder %s28, 0
      %p263 = por %p261, %p262
      %p264 = scmp.ne.s32.totalorder %s253, %s256
      %p265 = scmp.eq.s32.totalorder %s33, 3
      %p266 = por %p264, %p265
      %p267 = scmp.ne.s32.totalorder %s256, %s257
      %p268 = scmp.eq.s32.totalorder %s33, 0
      %p269 = por %p267, %p268
      %p270 = scmp.ne.s32.totalorder %s256, %s257
      %p271 = scmp.eq.s32.totalorder %s34, 3
      %p272 = por %p270, %p271
      %p274 = scmp.ne.s32.totalorder %s257, %s273
      %p275 = scmp.eq.s32.totalorder %s34, 0
      %p276 = por %p274, %p275
      %p277 = scmp.le.s32.totalorder 1, %s28
      %p278 = scmp.lt.s32.totalorder %s28, 5
      %p279 = pnand %p277, %p278
      %p280 = pneg %p279
      // Predicated region
      $region9: #{tpu_custom_call.1} parent=5 // pred_check
        _
      $region10: #{tpu_custom_call.1} parent=5 // pred_check_branch
        %282 = sbr.rel (%p279) target = $region12
      $region11: #{tpu_custom_call.1} parent=5 // pred_region
        %s283 = ssub.s32 %s28, 1
        // Predicated region
        $region13: #{tpu_custom_call.1} parent=11 // pred_check
          %p284 = pneg %p49
        $region14: #{tpu_custom_call.1} parent=11 // pred_check_branch
          %286 = sbr.rel (%p284) target = $region16
        $region15: #{tpu_custom_call.1} parent=11 // pred_region
          %s288 = ssub.s32 16, 16
          %289 = vsyncadd [#allocation5], %s288
          %292 = dma.hbm_to_smem %s0, 16, [#allocation2], [#allocation5]
        $region16: #{tpu_custom_call.1} parent=11 // pred_fallthru
          _
        // Predicated region
        $region17: #{tpu_custom_call.1} parent=11 // pred_check
          %p293 = pneg %p70
        $region18: #{tpu_custom_call.1} parent=11 // pred_check_branch
          %295 = sbr.rel (%p293) target = $region20
        $region19: #{tpu_custom_call.1} parent=11 // pred_region
          %s297 = ssub.s32 16, 16
          %298 = vsyncadd [#allocation7], %s297
          %301 = dma.hbm_to_smem %s1, 16, [#allocation6], [#allocation7]
        $region20: #{tpu_custom_call.1} parent=11 // pred_fallthru
          _
        // Predicated region
        $region21: #{tpu_custom_call.1} parent=11 // pred_check
          %p302 = pneg %p117
        $region22: #{tpu_custom_call.1} parent=11 // pred_check_branch
          %304 = sbr.rel (%p302) target = $region24
        $region23: #{tpu_custom_call.1} parent=11 // pred_region
          %s306 = ssub.s32 32, 32
          %307 = vsyncadd [#allocation10], %s306
          %s309 = sshll.u32 [#allocation9], 4
          %s310 = int_to_ptr.vmem [resolvable:$true] %s309
          %312 = dma.hbm_to_vmem [thread:$0]  %s3, 32, %s310, [#allocation10]
        $region24: #{tpu_custom_call.1} parent=11 // pred_fallthru
          _
        // Predicated region
        $region25: #{tpu_custom_call.1} parent=11 // pred_check
          %p313 = pneg %p138
        $region26: #{tpu_custom_call.1} parent=11 // pred_check_branch
          %315 = sbr.rel (%p313) target = $region28
        $region27: #{tpu_custom_call.1} parent=11 // pred_region
          %s317 = ssub.s32 32, 32
          %318 = vsyncadd [#allocation10], %s317
          %s320 = sshll.u32 [#allocation11], 4
          %s321 = int_to_ptr.vmem [resolvable:$true] %s320
          %323 = dma.hbm_to_vmem [thread:$0]  %s4, 32, %s321, [#allocation10]
        $region28: #{tpu_custom_call.1} parent=11 // pred_fallthru
          _
        // Predicated region
        $region29: #{tpu_custom_call.1} parent=11 // pred_check
          %p324 = pneg %p159
        $region30: #{tpu_custom_call.1} parent=11 // pred_check_branch
          %326 = sbr.rel (%p324) target = $region32
        $region31: #{tpu_custom_call.1} parent=11 // pred_region
          %s328 = ssub.s32 3072, 3072
          %329 = vsyncadd [#allocation13], %s328
          %s330 = sshll.u32 [#allocation12], 4
          %s331 = int_to_ptr.vmem [resolvable:$true] %s330
          %336 = dma.hbm_to_vmem [thread:$0]  %s5, 3072, %s331, [#allocation13], 128, 128, 8
        $region32: #{tpu_custom_call.1} parent=11 // pred_fallthru
          _
        // Predicated region
        $region33: #{tpu_custom_call.1} parent=11 // pred_check
          %p337 = pneg %p180
        $region34: #{tpu_custom_call.1} parent=11 // pred_check_branch
          %339 = sbr.rel (%p337) target = $region36
        $region35: #{tpu_custom_call.1} parent=11 // pred_region
          %s341 = ssub.s32 32, 32
          %342 = vsyncadd [#allocation13], %s341
          %s344 = sshll.u32 [#allocation14], 4
          %s345 = int_to_ptr.vmem [resolvable:$true] %s344
          %347 = dma.hbm_to_vmem [thread:$0]  %s6, 32, %s345, [#allocation13]
        $region36: #{tpu_custom_call.1} parent=11 // pred_fallthru
          _
        // Predicated region
        $region37: #{tpu_custom_call.1} parent=11 // pred_check
          %p348 = pneg %p201
        $region38: #{tpu_custom_call.1} parent=11 // pred_check_branch
          %350 = sbr.rel (%p348) target = $region40
        $region39: #{tpu_custom_call.1} parent=11 // pred_region
          %s352 = ssub.s32 1024, 1024
          %353 = vsyncadd [#allocation16], %s352
          %s354 = sshll.u32 [#allocation15], 4
          %s355 = int_to_ptr.vmem [resolvable:$true] %s354
          %360 = dma.hbm_to_vmem [thread:$0]  %s7, 1024, %s355, [#allocation16], 256, 256, 16
        $region40: #{tpu_custom_call.1} parent=11 // pred_fallthru
          _
        // Predicated region
        $region41: #{tpu_custom_call.1} parent=11 // pred_check
          %p361 = pneg %p222
        $region42: #{tpu_custom_call.1} parent=11 // pred_check_branch
          %363 = sbr.rel (%p361) target = $region44
        $region43: #{tpu_custom_call.1} parent=11 // pred_region
          %s365 = ssub.s32 32, 32
          %366 = vsyncadd [#allocation16], %s365
          %s368 = sshll.u32 [#allocation17], 4
          %s369 = int_to_ptr.vmem [resolvable:$true] %s368
          %371 = dma.hbm_to_vmem [thread:$0]  %s8, 32, %s369, [#allocation16]
        $region44: #{tpu_custom_call.1} parent=11 // pred_fallthru
          _
        // Predicated region
        $region45: #{tpu_custom_call.1} parent=11 // pred_check
          %p372 = pneg %p243
        $region46: #{tpu_custom_call.1} parent=11 // pred_check_branch
          %374 = sbr.rel (%p372) target = $region48
        $region47: #{tpu_custom_call.1} parent=11 // pred_region
          %s376 = ssub.s32 32, 32
          %377 = vsyncadd [#allocation19], %s376
          %s379 = sshll.u32 [#allocation18], 4
          %s380 = int_to_ptr.vmem [resolvable:$true] %s379
          %382 = dma.hbm_to_vmem [thread:$0]  %s9, 32, %s380, [#allocation19]
        $region48: #{tpu_custom_call.1} parent=11 // pred_fallthru
          _
      $region12: #{tpu_custom_call.1} parent=5 // pred_fallthru
        _
      %p383 = scmp.lt.s32.totalorder %s28, 4
      // Predicated region
      $region49: #{tpu_custom_call.1} parent=5 // pred_check
        %p384 = pneg %p383
      $region50: #{tpu_custom_call.1} parent=5 // pred_check_branch
        %386 = sbr.rel (%p384) target = $region52
      $region51: #{tpu_custom_call.1} parent=5 // pred_region
        // Predicated region
        $region53: #{tpu_custom_call.1} parent=51 // pred_check
          %p387 = pneg %p90
        $region54: #{tpu_custom_call.1} parent=51 // pred_check_branch
          %389 = sbr.rel (%p387) target = $region56
        $region55: #{tpu_custom_call.1} parent=51 // pred_region
          %s390 = sand.u32 %s80, 1
          %s391 = scalar_lea.sflag [#allocation3], %s390
          %s392 = sand.u32 %s80, 1
          %s393 = smul.addr %s392, 32
          %s394 = scalar_lea.vmem [#allocation8], %s393
          %s396 = ssub.s32 512, 512
          %397 = vsyncadd %s391, %s396
          %s398 = smul.addr %s28, 4
          %s399 = smul.addr %s398, 128
          %s400 = scalar_lea.hbm %s2, %s399
          %s401 = sshll.u32 %s394, 4
          %s402 = int_to_ptr.vmem [resolvable:$true] %s401
          %407 = dma.hbm_to_vmem [thread:$0]  %s400, 512, %s402, %s391, 256, 256, 16
        $region56: #{tpu_custom_call.1} parent=51 // pred_fallthru
          _
      $region52: #{tpu_custom_call.1} parent=5 // pred_fallthru
        _
      %p408 = scmp.le.s32.totalorder 1, %s28
      %p409 = scmp.lt.s32.totalorder %s28, 5
      %p410 = pnand %p408, %p409
      %p411 = pneg %p410
      // Predicated region
      $region57: #{tpu_custom_call.1} parent=5 // pred_check
        _
      $region58: #{tpu_custom_call.1} parent=5 // pred_check_branch
        %413 = sbr.rel (%p410) target = $region60
      $region59: #{tpu_custom_call.1} parent=5 // pred_region
        %s414 = ssub.s32 %s28, 1
        // Predicated region
        $region61: #{tpu_custom_call.1} parent=59 // pred_check
          %p415 = pneg %p49
        $region62: #{tpu_custom_call.1} parent=59 // pred_check_branch
          %417 = sbr.rel (%p415) target = $region64
        $region63: #{tpu_custom_call.1} parent=59 // pred_region
          %418 = dma.done [#allocation5], 16
        $region64: #{tpu_custom_call.1} parent=59 // pred_fallthru
          _
        // Predicated region
        $region65: #{tpu_custom_call.1} parent=59 // pred_check
          %p419 = pneg %p70
        $region66: #{tpu_custom_call.1} parent=59 // pred_check_branch
          %421 = sbr.rel (%p419) target = $region68
        $region67: #{tpu_custom_call.1} parent=59 // pred_region
          %422 = dma.done [#allocation7], 16
        $region68: #{tpu_custom_call.1} parent=59 // pred_fallthru
          _
        %s423 = sand.u32 %s83, 1
        %s424 = scalar_lea.sflag [#allocation3], %s423
        %s425 = sand.u32 %s83, 1
        %s426 = smul.addr %s425, 32
        %s427 = scalar_lea.vmem [#allocation8], %s426
        // Predicated region
        $region69: #{tpu_custom_call.1} parent=59 // pred_check
          %p428 = pneg %p96
        $region70: #{tpu_custom_call.1} parent=59 // pred_check_branch
          %430 = sbr.rel (%p428) target = $region72
        $region71: #{tpu_custom_call.1} parent=59 // pred_region
          %431 = dma.done %s424, 512
        $region72: #{tpu_custom_call.1} parent=59 // pred_fallthru
          _
        // Predicated region
        $region73: #{tpu_custom_call.1} parent=59 // pred_check
          %p432 = pneg %p117
        $region74: #{tpu_custom_call.1} parent=59 // pred_check_branch
          %434 = sbr.rel (%p432) target = $region76
        $region75: #{tpu_custom_call.1} parent=59 // pred_region
          %435 = dma.done [#allocation10], 32
        $region76: #{tpu_custom_call.1} parent=59 // pred_fallthru
          _
        // Predicated region
        $region77: #{tpu_custom_call.1} parent=59 // pred_check
          %p436 = pneg %p138
        $region78: #{tpu_custom_call.1} parent=59 // pred_check_branch
          %438 = sbr.rel (%p436) target = $region80
        $region79: #{tpu_custom_call.1} parent=59 // pred_region
          %439 = dma.done [#allocation10], 32
        $region80: #{tpu_custom_call.1} parent=59 // pred_fallthru
          _
        // Predicated region
        $region81: #{tpu_custom_call.1} parent=59 // pred_check
          %p440 = pneg %p159
        $region82: #{tpu_custom_call.1} parent=59 // pred_check_branch
          %442 = sbr.rel (%p440) target = $region84
        $region83: #{tpu_custom_call.1} parent=59 // pred_region
          %443 = dma.done [#allocation13], 3072
        $region84: #{tpu_custom_call.1} parent=59 // pred_fallthru
          _
        // Predicated region
        $region85: #{tpu_custom_call.1} parent=59 // pred_check
          %p444 = pneg %p180
        $region86: #{tpu_custom_call.1} parent=59 // pred_check_branch
          %446 = sbr.rel (%p444) target = $region88
        $region87: #{tpu_custom_call.1} parent=59 // pred_region
          %447 = dma.done [#allocation13], 32
        $region88: #{tpu_custom_call.1} parent=59 // pred_fallthru
          _
        // Predicated region
        $region89: #{tpu_custom_call.1} parent=59 // pred_check
          %p448 = pneg %p201
        $region90: #{tpu_custom_call.1} parent=59 // pred_check_branch
          %450 = sbr.rel (%p448) target = $region92
        $region91: #{tpu_custom_call.1} parent=59 // pred_region
          %451 = dma.done [#allocation16], 1024
        $region92: #{tpu_custom_call.1} parent=59 // pred_fallthru
          _
        // Predicated region
        $region93: #{tpu_custom_call.1} parent=59 // pred_check
          %p452 = pneg %p222
        $region94: #{tpu_custom_call.1} parent=59 // pred_check_branch
          %454 = sbr.rel (%p452) target = $region96
        $region95: #{tpu_custom_call.1} parent=59 // pred_region
          %455 = dma.done [#allocation16], 32
        $region96: #{tpu_custom_call.1} parent=59 // pred_fallthru
          _
        // Predicated region
        $region97: #{tpu_custom_call.1} parent=59 // pred_check
          %p456 = pneg %p243
        $region98: #{tpu_custom_call.1} parent=59 // pred_check_branch
          %458 = sbr.rel (%p456) target = $region100
        $region99: #{tpu_custom_call.1} parent=59 // pred_region
          %459 = dma.done [#allocation19], 32
        $region100: #{tpu_custom_call.1} parent=59 // pred_fallthru
          _
        %460 = sfence
        %p461 = pneg %p49
        %p462 = pneg %p46
        %p463 = pneg %p70
        %p464 = pneg %p67
        %s465 = sand.u32 %s83, 1
        %s466 = scalar_lea.sflag [#allocation3], %s465
        %s467 = sand.u32 %s83, 1
        %s468 = smul.addr %s467, 32
        %s469 = scalar_lea.vmem [#allocation8], %s468
        %p470 = pneg %p96
        %p471 = pneg %p93
        %p472 = pneg %p117
        %p473 = pneg %p114
        %p474 = pneg %p138
        %p475 = pneg %p135
        %p476 = pneg %p159
        %p477 = pneg %p156
        %p478 = pneg %p180
        %p479 = pneg %p177
        %p480 = pneg %p201
        %p481 = pneg %p198
        %p482 = pneg %p222
        %p483 = pneg %p219
        %p484 = pneg %p243
        %p485 = pneg %p240
        %p486 = pneg %p269
        %p487 = pneg %p266
        %s488 = sand.u32 %s256, 1
        %s489 = scalar_lea.sflag [#allocation4], %s488
        %s490 = sand.u32 %s256, 1
        %s491 = smul.addr %s490, 64
        %s492 = scalar_lea.vmem [#allocation20], %s491
        %v494 = vld [vmem:[%s427] sm:$0xff]
        %v495 = vld [vmem:[%s427 + $0x8] sm:$0xff]
        %v496 = vld [vmem:[%s427 + $0x10] sm:$0xff]
        %v497 = vld [vmem:[%s427 + $0x18] sm:$0xff]
        %s498 = sld [smem:[#allocation2 + %s33]]
        %v499 = vstv %s498
        %v500 = vmul.f32 %v494, %v499
        %v501 = vmul.f32 %v495, %v499
        %v502 = vmul.f32 %v496, %v499
        %v503 = vmul.f32 %v497, %v499
        %s504 = sld [smem:[#allocation6 + %s33]]
        %v505 = vstv %s504
        %v506 = vadd.f32 %v500, %v505
        %v507 = vadd.f32 %v501, %v505
        %v508 = vadd.f32 %v502, %v505
        %v509 = vadd.f32 %v503, %v505
        %v510 = vmax.f32 %v506, 0.0
        %v511 = vmax.f32 %v507, 0.0
        %v512 = vmax.f32 %v508, 0.0
        %v513 = vmax.f32 %v509, 0.0
        %v514 = vmin.f32 %v510, 1.0
        %v515 = vmin.f32 %v511, 1.0
        %v516 = vmin.f32 %v512, 1.0
        %v517 = vmin.f32 %v513, 1.0
        %v518 = vmul.f32 %v514, 255.0
        %v519 = vmul.f32 %v515, 255.0
        %v520 = vmul.f32 %v516, 255.0
        %v521 = vmul.f32 %v517, 255.0
        %v522 = vfloor.f32 %v518
        %v523 = vfloor.f32 %v519
        %v524 = vfloor.f32 %v520
        %v525 = vfloor.f32 %v521
        %v526 = vmul.f32 %v522, 0.003921569
        %v527 = vmul.f32 %v523, 0.003921569
        %v528 = vmul.f32 %v524, 0.003921569
        %v529 = vmul.f32 %v525, 0.003921569
        %v530 = vld [vmem:[#allocation9] sm:$0x3]
        %v532 = vlaneseq
        %v533 = vshrl.u32 %v532, 7
        %v534 = vsub.s32 0, %v533
        %v535 = vrot.slane %v530, %v534
        %v536 = vlaneseq
        %v537 = vshrl.u32 %v536, 7
        %v538 = vsub.s32 1, %v537
        %v539 = vrot.slane %v530, %v538
        %v542 = vsub.f32 %v526, %v535
        %v543 = vsub.f32 %v527, %v539
        %v544 = vsub.f32 %v528, %v535
        %v545 = vsub.f32 %v529, %v539
        %v546 = vld [vmem:[#allocation11] sm:$0x3]
        %v548 = vlaneseq
        %v549 = vshrl.u32 %v548, 7
        %v550 = vsub.s32 0, %v549
        %v551 = vrot.slane %v546, %v550
        %v552 = vlaneseq
        %v553 = vshrl.u32 %v552, 7
        %v554 = vsub.s32 1, %v553
        %v555 = vrot.slane %v546, %v554
        %v558 = vmul.f32 %v542, %v551
        %v559 = vmul.f32 %v543, %v555
        %v560 = vmul.f32 %v544, %v551
        %v561 = vmul.f32 %v545, %v555
        %v562 = vpack.c.bf16 %v560, %v558
        %v563 = vpack.c.bf16 %v561, %v559
        %v564 = vld [vmem:[#allocation12] sm:$0xff]
        %v565 = vld [vmem:[#allocation12 + $0x8] sm:$0xff]
        %v566 = vld [vmem:[#allocation12 + $0x10] sm:$0xff]
        %v567 = vld [vmem:[#allocation12 + $0x18] sm:$0xff]
        %v568 = vld [vmem:[#allocation12 + $0x20] sm:$0xff]
        %v569 = vld [vmem:[#allocation12 + $0x28] sm:$0xff]
        %v570 = vld [vmem:[#allocation12 + $0x30] sm:$0xff]
        %v571 = vld [vmem:[#allocation12 + $0x38] sm:$0xff]
        %v572 = vld [vmem:[#allocation12 + $0x40] sm:$0xff]
        %v573 = vld [vmem:[#allocation12 + $0x48] sm:$0xff]
        %v574 = vld [vmem:[#allocation12 + $0x50] sm:$0xff]
        %v575 = vld [vmem:[#allocation12 + $0x58] sm:$0xff]
        %v576 = vld [vmem:[#allocation12 + $0x60] sm:$0xff]
        %v577 = vld [vmem:[#allocation12 + $0x68] sm:$0xff]
        %v578 = vld [vmem:[#allocation12 + $0x70] sm:$0xff]
        %v579 = vld [vmem:[#allocation12 + $0x78] sm:$0xff]
        %v580 = vld [vmem:[#allocation12 + $0x80] sm:$0xff]
        %v581 = vld [vmem:[#allocation12 + $0x88] sm:$0xff]
        %v582 = vld [vmem:[#allocation12 + $0x90] sm:$0xff]
        %v583 = vld [vmem:[#allocation12 + $0x98] sm:$0xff]
        %v584 = vld [vmem:[#allocation12 + $0xa0] sm:$0xff]
        %v585 = vld [vmem:[#allocation12 + $0xa8] sm:$0xff]
        %v586 = vld [vmem:[#allocation12 + $0xb0] sm:$0xff]
        %v587 = vld [vmem:[#allocation12 + $0xb8] sm:$0xff]
        %v612 = vunpack.c.l.b16 %v564
        %v613 = vunpack.c.h.b16 %v564
        %v614 = vunpack.c.l.b16 %v565
        %v615 = vunpack.c.h.b16 %v565
        %v616 = vunpack.c.l.b16 %v566
        %v617 = vunpack.c.h.b16 %v566
        %v618 = vunpack.c.l.b16 %v567
        %v619 = vunpack.c.h.b16 %v567
        %v620 = vunpack.c.l.b16 %v568
        %v621 = vunpack.c.h.b16 %v568
        %v622 = vunpack.c.l.b16 %v569
        %v623 = vunpack.c.h.b16 %v569
        %v624 = vunpack.c.l.b16 %v570
        %v625 = vunpack.c.h.b16 %v570
        %v626 = vunpack.c.l.b16 %v571
        %v627 = vunpack.c.h.b16 %v571
        %v628 = vunpack.c.l.b16 %v572
        %v629 = vunpack.c.h.b16 %v572
        %v630 = vunpack.c.l.b16 %v573
        %v631 = vunpack.c.h.b16 %v573
        %v632 = vunpack.c.l.b16 %v574
        %v633 = vunpack.c.h.b16 %v574
        %v634 = vunpack.c.l.b16 %v575
        %v635 = vunpack.c.h.b16 %v575
        %v636 = vunpack.c.l.b16 %v576
        %v637 = vunpack.c.h.b16 %v576
        %v638 = vunpack.c.l.b16 %v577
        %v639 = vunpack.c.h.b16 %v577
        %v640 = vunpack.c.l.b16 %v578
        %v641 = vunpack.c.h.b16 %v578
        %v642 = vunpack.c.l.b16 %v579
        %v643 = vunpack.c.h.b16 %v579
        %v644 = vunpack.c.l.b16 %v580
        %v645 = vunpack.c.h.b16 %v580
        %v646 = vunpack.c.l.b16 %v581
        %v647 = vunpack.c.h.b16 %v581
        %v648 = vunpack.c.l.b16 %v582
        %v649 = vunpack.c.h.b16 %v582
        %v650 = vunpack.c.l.b16 %v583
        %v651 = vunpack.c.h.b16 %v583
        %v652 = vunpack.c.l.b16 %v584
        %v653 = vunpack.c.h.b16 %v584
        %v654 = vunpack.c.l.b16 %v585
        %v655 = vunpack.c.h.b16 %v585
        %v656 = vunpack.c.l.b16 %v586
        %v657 = vunpack.c.h.b16 %v586
        %v658 = vunpack.c.l.b16 %v587
        %v659 = vunpack.c.h.b16 %v587
        %v660 = vpack.c.b16 %v614, %v612
        %v661 = vpack.c.b16 %v615, %v613
        %v662 = vpack.c.b16 %v618, %v616
        %v663 = vpack.c.b16 %v619, %v617
        %v664 = vpack.c.b16 %v622, %v620
        %v665 = vpack.c.b16 %v623, %v621
        %v666 = vpack.c.b16 %v626, %v624
        %v667 = vpack.c.b16 %v627, %v625
        %v668 = vpack.c.b16 %v630, %v628
        %v669 = vpack.c.b16 %v631, %v629
        %v670 = vpack.c.b16 %v634, %v632
        %v671 = vpack.c.b16 %v635, %v633
        %v672 = vpack.c.b16 %v638, %v636
        %v673 = vpack.c.b16 %v639, %v637
        %v674 = vpack.c.b16 %v642, %v640
        %v675 = vpack.c.b16 %v643, %v641
        %v676 = vpack.c.b16 %v646, %v644
        %v677 = vpack.c.b16 %v647, %v645
        %v678 = vpack.c.b16 %v650, %v648
        %v679 = vpack.c.b16 %v651, %v649
        %v680 = vpack.c.b16 %v654, %v652
        %v681 = vpack.c.b16 %v655, %v653
        %v682 = vpack.c.b16 %v658, %v656
        %v683 = vpack.c.b16 %v659, %v657
        %vm708 = vcmask 523264
        %v710 = vsel %vm708, %v563, 0
        %712 = vmatprep.subr.bf16.mxu0 %v661
        %713 = vmatpush1.bf16.msra.mxu0 %v660
        %714 = vmatprep.subr.bf16.mxu0 %v663
        %715 = vmatpush1.bf16.msra.mxu0 %v662
        %716 = vmatprep.subr.bf16.mxu0 %v665
        %717 = vmatpush1.bf16.msra.mxu0 %v664
        %718 = vmatprep.subr.bf16.mxu0 %v667
        %719 = vmatpush1.bf16.msra.mxu0 %v666
        %720 = vmatprep.subr.bf16.mxu0 %v669
        %721 = vmatpush1.bf16.msra.mxu0 %v668
        %722 = vmatprep.subr.bf16.mxu0 %v671
        %723 = vmatpush1.bf16.msra.mxu0 %v670
        %724 = vmatprep.subr.bf16.mxu0 %v673
        %725 = vmatpush1.bf16.msra.mxu0 %v672
        %726 = vmatprep.subr.bf16.mxu0 %v675
        %727 = vmatpush1.bf16.msra.mxu0 %v674
        %728 = vmatprep.subr.bf16.mxu0 %v677
        %729 = vmatpush1.bf16.msra.mxu0 %v676
        %730 = vmatprep.subr.bf16.mxu0 %v679
        %731 = vmatpush1.bf16.msra.mxu0 %v678
        %732 = vmatprep.subr.bf16.mxu0 %v681
        %733 = vmatpush1.bf16.msra.mxu0 %v680
        %734 = vmatprep.subr.bf16.mxu0 %v683
        %735 = vmatpush1.bf16.msra.mxu0 %v682
        %736 = vmatprep.subr.bf16.mxu0 0
        %737 = vmatpush1.bf16.msra.mxu0 0
        %738 = vmatprep.subr.bf16.mxu0 0
        %739 = vmatpush1.bf16.msra.mxu0 0
        %740 = vmatprep.subr.bf16.mxu0 0
        %741 = vmatpush1.bf16.msra.mxu0 0
        %742 = vmatprep.subr.bf16.mxu0 0
        %743 = vmatpush1.bf16.msra.mxu0 0
        %744 = vmatprep.mubr.bf16.mxu0 %v710
        %745 = vmatmul.mubr.bf16.gmra.mrb[0].mxu0 %v562
        %v746 = vpop.f32.mrb[0].mxu0
        %v747 = vadd.f32 0.0, %v746
        %v748 = vpop.f32.mrb[0].mxu0
        %v749 = vadd.f32 0.0, %v748
        %v750 = vpop.f32.mrb[0].mxu0
        %v751 = vadd.f32 0.0, %v750
        %v752 = vpop.f32.mrb[0].mxu0
        %v753 = vadd.f32 0.0, %v752
        %754 = vdwg.mxu0
        %v755 = vld [vmem:[#allocation14] sm:$0x3]
        %v757 = vlaneseq
        %v758 = vshrl.u32 %v757, 7
        %v759 = vsub.s32 0, %v758
        %v760 = vrot.slane %v755, %v759
        %v761 = vlaneseq
        %v762 = vshrl.u32 %v761, 7
        %v763 = vsub.s32 1, %v762
        %v764 = vrot.slane %v755, %v763
        %vm771 = vcmask 1040384
        %v772 = vrot.slane %v747, 7
        %v773 = vrot.slane %v749, 7
        %v774 = vrot.slane %v751, 7
        %v775 = vsel %vm771, %v772, %v774
        %v776 = vrot.slane %v753, 7
        %v777 = vsel %vm771, %v773, %v776
        %v784 = vsel %vm771, %v760, %v772
        %v785 = vsel %vm771, %v764, %v773
        %v786 = vsel %vm771, %v774, 0.0
        %v787 = vsel %vm771, %v776, 0.0
        %v788 = vld [vmem:[#allocation15] sm:$0xff]
        %v789 = vld [vmem:[#allocation15 + $0x8] sm:$0xff]
        %v790 = vld [vmem:[#allocation15 + $0x10] sm:$0xff]
        %v791 = vld [vmem:[#allocation15 + $0x18] sm:$0xff]
        %v792 = vld [vmem:[#allocation15 + $0x20] sm:$0xff]
        %v793 = vld [vmem:[#allocation15 + $0x28] sm:$0xff]
        %v794 = vld [vmem:[#allocation15 + $0x30] sm:$0xff]
        %v795 = vld [vmem:[#allocation15 + $0x38] sm:$0xff]
        %v796 = vadd.f32 %v784, %v788
        %v797 = vadd.f32 %v785, %v789
        %v798 = vadd.f32 %v775, %v790
        %v799 = vadd.f32 %v777, %v791
        %v800 = vadd.f32 %v786, %v792
        %v801 = vadd.f32 %v787, %v793
        %v802 = vadd.f32 %v794, 0.0
        %v803 = vadd.f32 %v795, 0.0
        %v804 = vadd.f32 %v796, %v797
        %805 = vadd.xlane.f32.xlu0 %v804
        %v806 = vpop.xlane.xlu0 %805
        %v807 = vadd.f32 %v798, %v799
        %808 = vadd.xlane.f32.xlu0 %v807
        %v809 = vpop.xlane.xlu0 %808
        %v810 = vadd.f32 %v800, %v801
        %811 = vadd.xlane.f32.xlu0 %v810
        %v812 = vpop.xlane.xlu0 %811
        %v813 = vadd.f32 %v802, %v803
        %814 = vadd.xlane.f32.xlu0 %v813
        %v815 = vpop.xlane.xlu0 %814
        %v816 = vrcp.pop 256.0
        %v817 = vmul.f32 %v806, %v816
        %v818 = vmul.f32 %v809, %v816
        %v819 = vmul.f32 %v812, %v816
        %v820 = vmul.f32 %v815, %v816
        %v821 = vsub.f32 %v796, %v817
        %v822 = vsub.f32 %v797, %v817
        %v823 = vsub.f32 %v798, %v818
        %v824 = vsub.f32 %v799, %v818
        %v825 = vsub.f32 %v800, %v819
        %v826 = vsub.f32 %v801, %v819
        %v827 = vsub.f32 %v802, %v820
        %v828 = vsub.f32 %v803, %v820
        %v829 = vmul.f32 %v821, %v821
        %v830 = vmul.f32 %v822, %v822
        %v831 = vmul.f32 %v823, %v823
        %v832 = vmul.f32 %v824, %v824
        %v833 = vmul.f32 %v825, %v825
        %v834 = vmul.f32 %v826, %v826
        %v835 = vmul.f32 %v827, %v827
        %v836 = vmul.f32 %v828, %v828
        %v837 = vadd.f32 %v829, %v830
        %838 = vadd.xlane.f32.xlu0 %v837
        %v839 = vpop.xlane.xlu0 %838
        %v840 = vadd.f32 %v831, %v832
        %841 = vadd.xlane.f32.xlu0 %v840
        %v842 = vpop.xlane.xlu0 %841
        %v843 = vadd.f32 %v833, %v834
        %844 = vadd.xlane.f32.xlu0 %v843
        %v845 = vpop.xlane.xlu0 %844
        %v846 = vadd.f32 %v835, %v836
        %847 = vadd.xlane.f32.xlu0 %v846
        %v848 = vpop.xlane.xlu0 %847
        %v849 = vmul.f32 %v839, %v816
        %v850 = vmul.f32 %v842, %v816
        %v851 = vmul.f32 %v845, %v816
        %v852 = vmul.f32 %v848, %v816
        %v853 = vadd.f32 %v849, 1e-05
        %v854 = vadd.f32 %v850, 1e-05
        %v855 = vadd.f32 %v851, 1e-05
        %v856 = vadd.f32 %v852, 1e-05
        %v857 = vrsqrt.pop %v853
        %v858 = vrsqrt.pop %v854
        %v859 = vrsqrt.pop %v855
        %v860 = vrsqrt.pop %v856
        %v861 = vmul.f32 %v821, %v857
        %v862 = vmul.f32 %v822, %v857
        %v863 = vmul.f32 %v823, %v858
        %v864 = vmul.f32 %v824, %v858
        %v865 = vmul.f32 %v825, %v859
        %v866 = vmul.f32 %v826, %v859
        %v867 = vmul.f32 %v827, %v860
        %v868 = vmul.f32 %v828, %v860
        %v869 = vld [vmem:[#allocation17] sm:$0x3]
        %v871 = vlaneseq
        %v872 = vshrl.u32 %v871, 7
        %v873 = vsub.s32 0, %v872
        %v874 = vrot.slane %v869, %v873
        %v875 = vlaneseq
        %v876 = vshrl.u32 %v875, 7
        %v877 = vsub.s32 1, %v876
        %v878 = vrot.slane %v869, %v877
        %v881 = vmul.f32 %v861, %v874
        %v882 = vmul.f32 %v862, %v878
        %v883 = vmul.f32 %v863, %v874
        %v884 = vmul.f32 %v864, %v878
        %v885 = vmul.f32 %v865, %v874
        %v886 = vmul.f32 %v866, %v878
        %v887 = vmul.f32 %v867, %v874
        %v888 = vmul.f32 %v868, %v878
        %v889 = vld [vmem:[#allocation18] sm:$0x3]
        %v891 = vlaneseq
        %v892 = vshrl.u32 %v891, 7
        %v893 = vsub.s32 0, %v892
        %v894 = vrot.slane %v889, %v893
        %v895 = vlaneseq
        %v896 = vshrl.u32 %v895, 7
        %v897 = vsub.s32 1, %v896
        %v898 = vrot.slane %v889, %v897
        %v901 = vadd.f32 %v881, %v894
        %v902 = vadd.f32 %v882, %v898
        %v903 = vadd.f32 %v883, %v894
        %v904 = vadd.f32 %v884, %v898
        %v905 = vadd.f32 %v885, %v894
        %v906 = vadd.f32 %v886, %v898
        %v907 = vadd.f32 %v887, %v894
        %v908 = vadd.f32 %v888, %v898
        %909 = vst [vmem:[%s492] sm:$0xff] %v901
        %910 = vst [vmem:[%s492 + $0x8] sm:$0xff] %v902
        %911 = vst [vmem:[%s492 + $0x10] sm:$0xff] %v903
        %912 = vst [vmem:[%s492 + $0x18] sm:$0xff] %v904
        %913 = vst [vmem:[%s492 + $0x20] sm:$0xff] %v905
        %914 = vst [vmem:[%s492 + $0x28] sm:$0xff] %v906
        %915 = vst [vmem:[%s492 + $0x30] sm:$0xff] %v907
        %916 = vst [vmem:[%s492 + $0x38] sm:$0xff] %v908
        %s917 = sand.u32 %s256, 1
        %s918 = scalar_lea.sflag [#allocation4], %s917
        %s919 = sand.u32 %s256, 1
        %s920 = smul.addr %s919, 64
        %s921 = scalar_lea.vmem [#allocation20], %s920
        // Predicated region
        $region101: #{tpu_custom_call.1} parent=59 // pred_check
          %p922 = pneg %p266
        $region102: #{tpu_custom_call.1} parent=59 // pred_check_branch
          %924 = sbr.rel (%p922) target = $region104
        $region103: #{tpu_custom_call.1} parent=59 // pred_region
          %s926 = ssub.s32 1024, 1024
          %927 = vsyncadd %s918, %s926
          %s928 = smul.addr %s33, 8
          %s929 = smul.addr %s928, 128
          %s930 = scalar_lea.hbm %s10, %s929
          %s931 = sshll.u32 %s921, 4
          %s932 = int_to_ptr.vmem [resolvable:$true] %s931
          %937 = dma.vmem_to_hbm [thread:$0]  %s932, 1024, %s930, %s918, 256, 256, 16
        $region104: #{tpu_custom_call.1} parent=59 // pred_fallthru
          _
      $region60: #{tpu_custom_call.1} parent=5 // pred_fallthru
        _
      %p938 = scmp.le.s32.totalorder 2, %s28
      // Predicated region
      $region105: #{tpu_custom_call.1} parent=5 // pred_check
        %p939 = pneg %p938
      $region106: #{tpu_custom_call.1} parent=5 // pred_check_branch
        %941 = sbr.rel (%p939) target = $region108
      $region107: #{tpu_custom_call.1} parent=5 // pred_region
        %s942 = ssub.s32 %s28, 2
        // Predicated region
        $region109: #{tpu_custom_call.1} parent=107 // pred_check
          %p943 = pneg %p272
        $region110: #{tpu_custom_call.1} parent=107 // pred_check_branch
          %945 = sbr.rel (%p943) target = $region112
        $region111: #{tpu_custom_call.1} parent=107 // pred_region
          %s946 = sand.u32 %s257, 1
          %s947 = scalar_lea.sflag [#allocation4], %s946
          %s948 = sand.u32 %s257, 1
          %s949 = smul.addr %s948, 64
          %s950 = scalar_lea.vmem [#allocation20], %s949
          %951 = dma.done %s947, 1024
        $region112: #{tpu_custom_call.1} parent=107 // pred_fallthru
          _
      $region108: #{tpu_custom_call.1} parent=5 // pred_fallthru
        _
    $region6: #{tpu_custom_call.1} parent=1 // loop_footer
      %s32 = sadd.s32 1, %s28
    $region7: #{tpu_custom_call.1} parent=1 // loop_footer_branch
      %27 = sbr.rel target = $region3
    $region8: #{tpu_custom_call.1} parent=1 // loop_exit
      _
    %952 = vsyncpa [#allocation3], 1
    %s953 = scalar_lea.sflag [#allocation3], 1
    %954 = vsyncpa %s953, 1
    %955 = vsyncpa [#allocation10], 1
    %956 = vsyncpa [#allocation13], 1
    %957 = vsyncpa [#allocation16], 1
    %958 = vsyncpa [#allocation19], 1
    %959 = vsyncpa [#allocation4], 1
    %s960 = scalar_lea.sflag [#allocation4], 1
    %961 = vsyncpa %s960, 1
    %962 = vsyncpa [#allocation5], 1
    %s963 = scalar_lea.sflag [#allocation5], 1
    %964 = vsyncpa %s963, 1
    %965 = vsyncpa [#allocation7], 1

</llo_original>
